<compile_context>
chip_gen: v5e
topology: v5e:2x2
jax: 0.10.0
libtpu: 0.0.40
codegen_flags: <defaults>
</compile_context>

<pallas_src>
import jax
import jax.numpy as jnp
from jax.experimental import pallas as pl
from jax.experimental.pallas import tpu as pltpu

NEG_SLOPE = 0.01   # nn.LeakyReLU() default negative_slope
O_PAD = 128        # pad each branch's out_dim to a full 128-lane vreg width


def _round_up(x, m):
    return ((x + m - 1) // m) * m


def _leaky_relu(x):
    return jnp.maximum(x, NEG_SLOPE * x)


def _block_diag(blocks):
    """Block-diagonal matrix from a list of 2-D arrays (built once at prep time)."""
    rows = sum(b.shape[0] for b in blocks)
    cols = sum(b.shape[1] for b in blocks)
    out = jnp.zeros((rows, cols), jnp.float32)
    r = c = 0
    for b in blocks:
        out = out.at[r:r + b.shape[0], c:c + b.shape[1]].set(b)
        r += b.shape[0]
        c += b.shape[1]
    return out


# ---------------------------------------------------------------------------
# Fused kernel: one branch (grid axis 1), one batch tile (grid axis 0).
# 3 MXU matmuls + 2 LeakyReLUs, straight-line body.
# ---------------------------------------------------------------------------
def _fused_kernel(x_ref,      # (TB, CL)            f32
                  w1_ref,     # (CL, S*64)          bf16  conv1 with scale & fc1 folded in
                  b1_ref,     # (1,  S*64)          f32
                  w2_ref,     # (S*64, S*32)        bf16  fc2 block-diagonal over scales
                  b2_ref,     # (1,  S*32)          f32
                  wt_ref,     # (S*32, O_PAD)       bf16  conv2 with wF folded in
                  bt_ref,     # (1,  O_PAD)         f32   wF-weighted conv2 bias + final bias
                  out_ref):   # (TB, O_PAD)         f32
    x = x_ref[...].astype(jnp.bfloat16)
    # conv1 (+ per-scale input scaling + fc1 folded): (TB,CL)@(CL,S*64)
    h = jnp.dot(x, w1_ref[...], preferred_element_type=jnp.float32) + b1_ref[...]
    h = _leaky_relu(h)
    # fc2, block-diagonal across scales: (TB,S*64)@(S*64,S*32)
    h = jnp.dot(h.astype(jnp.bfloat16), w2_ref[...],
                preferred_element_type=jnp.float32) + b2_ref[...]
    h = _leaky_relu(h)
    # conv2 + wF-weighted sum over scales + final bias: (TB,S*32)@(S*32,O_PAD)
    out_ref[...] = jnp.dot(h.astype(jnp.bfloat16), wt_ref[...],
                           preferred_element_type=jnp.float32) + bt_ref[...]


# ---------------------------------------------------------------------------
# One-time parameter preparation: fold scale, fc1 and wF; stack per-branch.
# ---------------------------------------------------------------------------
def prepare_fused_params(params_mean, params_var, scales, out_dim):
    assert out_dim <= O_PAD, f"out_dim={out_dim} must be <= O_PAD={O_PAD}"
    S = len(scales)
    branches = (params_mean, params_var)

    w1_b, b1_b, w2_b, b2_b, wt_b, bt_b = [], [], [], [], [], []
    for p in branches:
        w1_cols, b1_cols, w2_blk, b2_cols = [], [], [], []
        wt = jnp.zeros((S * 32, O_PAD), jnp.float32)
        bt = jnp.zeros((O_PAD,), jnp.float32)
        for k in range(S):
            s_k = jnp.float32(scales[k])
            # Exact fold of fc1 into conv1 (both affine, no activation in between),
            # with the per-scale input scaling folded into the weight.
            w1_cols.append((s_k * p["w1t"][k]) @ p["wf1t"][k])                  # (CL, 64)
            b1_cols.append((p["b1"][k] @ p["wf1t"][k] + p["bf1"][k]).reshape(-1))
            w2_blk.append(p["wf2t"][k])                                         # (64, 32)
            b2_cols.append(p["bf2"][k].reshape(-1))                             # (32,)
            # conv2 with the final Linear(S,1) weight folded in, lane-padded.
            wt = wt.at[k * 32:(k + 1) * 32, :out_dim].set(p["wF"][k] * p["w2t"][k])
            bt = bt.at[:out_dim].add(p["wF"][k] * p["b2"][k].reshape(-1))
        bt = bt.at[:out_dim].add(p["bF"][0])                                    # final bias

        w1_b.append(jnp.concatenate(w1_cols, axis=1))   # (CL, S*64)
        b1_b.append(jnp.concatenate(b1_cols))           # (S*64,)
        w2_b.append(_block_diag(w2_blk))                 # (S*64, S*32)
        b2_b.append(jnp.concatenate(b2_cols))           # (S*32,)
        wt_b.append(wt)                                  # (S*32, O_PAD)
        bt_b.append(bt)                                  # (O_PAD,)

    # Leading axis = branch (0 = mean, 1 = var); selected by grid axis 1.
    return dict(
        w1=jnp.stack(w1_b).astype(jnp.bfloat16),          # (2, CL,   S*64)
        b1=jnp.stack(b1_b)[:, None, :],                   # (2, 1,    S*64)  f32
        w2=jnp.stack(w2_b).astype(jnp.bfloat16),          # (2, S*64, S*32)
        b2=jnp.stack(b2_b)[:, None, :],                   # (2, 1,    S*32)  f32
        w_tail=jnp.stack(wt_b).astype(jnp.bfloat16),      # (2, S*32, O_PAD)
        b_tail=jnp.stack(bt_b)[:, None, :],               # (2, 1,    O_PAD) f32
    )


_WEIGHT_NAMES = ("w1", "b1", "w2", "b2", "w_tail", "b_tail")


# ---------------------------------------------------------------------------
# Forward wrapper: one pallas_call, grid = (batch tiles, branch).
# ---------------------------------------------------------------------------
def channel_nn_forward(x, fused, out_dim, *, block_b=1024):
    """ChannelNN.forward: returns (out_mean, out_rho), each (B, out_dim)."""
    B = x.shape[0]
    x_flat = x.reshape(B, -1).astype(jnp.float32)     # NCL flattened, matches Conv1d
    CL = x_flat.shape[1]
    n1 = fused["b1"].shape[-1]                        # S*64
    n2 = fused["b2"].shape[-1]                        # S*32

    # Batch tile: multiple of 8 (f32 sublane).  Per-step VMEM is only a few MiB even
    # at tb=1024, well under scoped limits on v5e/v6e/v7x.
    tb = _round_up(min(block_b, max(B, 1)), 8)
    b_pad = _round_up(B, tb)
    if b_pad != B:
        x_flat = jnp.pad(x_flat, ((0, b_pad - B), (0, 0)))

    grid = (b_pad // tb, 2)                           # (batch tiles, branch)

    # Weights: one branch slice per grid step, full extent otherwise.
    w_specs = [
        pl.BlockSpec((None,) + fused[n].shape[1:], lambda i, b: (b, 0, 0))
        for n in _WEIGHT_NAMES
    ]

    # Advisory cost hint: the kernel is tiny and DMA-bound; let XLA overlap it.
    w_bytes = sum(int(fused[n].size) * fused[n].dtype.itemsize for n in _WEIGHT_NAMES)
    flops = 2 * B * 2 * (CL * n1 + n1 * n2 + n2 * O_PAD)
    bytes_accessed = w_bytes + B * CL * 4 + B * 2 * O_PAD * 4
    cost = pl.CostEstimate(flops=flops, transcendentals=0,
                           bytes_accessed=bytes_accessed)

    out = pl.pallas_call(
        _fused_kernel,
        out_shape=jax.ShapeDtypeStruct((b_pad, 2 * O_PAD), jnp.float32),
        grid=grid,
        in_specs=[pl.BlockSpec((tb, CL), lambda i, b: (i, 0))] + w_specs,
        out_specs=pl.BlockSpec((tb, O_PAD), lambda i, b: (i, b)),
        compiler_params=pltpu.CompilerParams(
            dimension_semantics=("parallel", "parallel"),
            vmem_limit_bytes=64 * 1024 * 1024),
        cost_estimate=cost,
    )(x_flat, *(fused[n] for n in _WEIGHT_NAMES))

    out_mean = out[:B, :out_dim]
    out_rho = out[:B, O_PAD:O_PAD + out_dim]
    return out_mean, out_rho


# ---------------------------------------------------------------------------
# Param init (PyTorch-style uniform; weights stored pre-transposed) + reference.
# ---------------------------------------------------------------------------
def _init_branch_params(key, n_scales, in_dim, seq_len, out_dim):
    CL = in_dim * seq_len
    keys = jax.random.split(key, 10)

    def u(k, shape, fan_in):
        bound = 1.0 / float(fan_in) ** 0.5
        return jax.random.uniform(k, shape, jnp.float32, -bound, bound)

    S = n_scales
    return dict(
        w1t=u(keys[0], (S, CL, 128), CL),      # conv1: (128, in_dim, seq_len) flat + T
        b1=u(keys[1], (S, 1, 128), CL),
        wf1t=u(keys[2], (S, 128, 64), 128),    # fc1: (64, 128) transposed
        bf1=u(keys[3], (S, 1, 64), 128),
        wf2t=u(keys[4], (S, 64, 32), 64),      # fc2: (32, 64) transposed
        bf2=u(keys[5], (S, 1, 32), 64),
        w2t=u(keys[6], (S, 32, out_dim), 32),  # conv2: (out_dim, 32, 1) flat + T
        b2=u(keys[7], (S, 1, out_dim), 32),
        wF=u(keys[8], (S,), S),                # Linear(S, 1) weight
        bF=u(keys[9], (1,), S),                # Linear(S, 1) bias
    )


def _branch_reference(x_flat, p, scales):
    """Pure-JAX f32 reference of one branch (unfused, for sanity checking)."""
    outs = []
    for k in range(len(scales)):
        xs = x_flat * scales[k]
        h1 = xs @ p["w1t"][k] + p["b1"][k]
        a1 = h1 @ p["wf1t"][k] + p["bf1"][k]
        h2 = jnp.where(a1 >= 0, a1, NEG_SLOPE * a1)
        a2 = h2 @ p["wf2t"][k] + p["bf2"][k]
        h3 = jnp.where(a2 >= 0, a2, NEG_SLOPE * a2)
        outs.append(h3 @ p["w2t"][k] + p["b2"][k])
    stacked = jnp.stack(outs, axis=-1)                  # (B, O, S)
    return jnp.einsum("bos,s->bo", stacked, p["wF"]) + p["bF"][0]


if __name__ == "__main__":
    # R['ChanNN_input_dim']=4, R['ChanNN_output_dim']=4, R['Chan_seq_len']=8,
    # R['ChanNN_scale']=[0.5, 1.0, 2.0]
    B, in_dim, seq_len, out_dim = 2, 4, 8, 4
    scales = (0.5, 1.0, 2.0)

    key = jax.random.PRNGKey(0)
    kx, km, kv = jax.random.split(key, 3)
    x = jax.random.normal(kx, (B, in_dim, seq_len), jnp.float32)  # NCL like Conv1d

    params_mean = _init_branch_params(km, len(scales), in_dim, seq_len, out_dim)
    params_var = _init_branch_params(kv, len(scales), in_dim, seq_len, out_dim)

    # One-time weight fusion (scale / fc1 / wF folding, block-diagonal builds).
    fused = jax.tree_util.tree_map(
        jax.block_until_ready,
        prepare_fused_params(params_mean, params_var, scales, out_dim))

    out_mean, out_rho = channel_nn_forward(x, fused, out_dim)
    jax.block_until_ready((out_mean, out_rho))

    assert out_mean.shape == (B, out_dim) and out_rho.shape == (B, out_dim)

    # Sanity-check against the unfused pure-JAX f32 reference.
    # Tolerance accounts for bf16 weight/operand storage inside the kernel.
    x_flat = x.reshape(B, -1)
    ref_mean = _branch_reference(x_flat, params_mean, scales)
    ref_rho = _branch_reference(x_flat, params_var, scales)
    assert jnp.allclose(out_mean, ref_mean, atol=2e-2, rtol=2e-2), \
        float(jnp.max(jnp.abs(out_mean - ref_mean)))
    assert jnp.allclose(out_rho, ref_rho, atol=2e-2, rtol=2e-2), \
        float(jnp.max(jnp.abs(out_rho - ref_rho)))

    print("KERNEL_OK")
</pallas_src>

<mosaic_0001>
module attributes {stable_mosaic.version = 11 : i64} {
  func.func @_fused_kernel(%arg0: i32, %arg1: i32, %arg2: memref<8x32xf32, #tpu.memory_space<vmem>>, %arg3: memref<1x32x192xbf16, #tpu.memory_space<vmem>>, %arg4: memref<1x1x192xf32, #tpu.memory_space<vmem>>, %arg5: memref<1x192x96xbf16, #tpu.memory_space<vmem>>, %arg6: memref<1x1x96xf32, #tpu.memory_space<vmem>>, %arg7: memref<1x96x128xbf16, #tpu.memory_space<vmem>>, %arg8: memref<1x1x128xf32, #tpu.memory_space<vmem>>, %arg9: memref<8x128xf32, #tpu.memory_space<vmem>>) attributes {dimension_semantics = [#tpu.dimension_semantics<parallel>, #tpu.dimension_semantics<parallel>], iteration_bounds = array<i64: 1, 2>, scalar_prefetch = 0 : i64, scratch_operands = 0 : i64, tpu.core_type = #tpu.core_type<tc>, window_params = [{transform_indices = @transform_0, window_bounds = array<i64: 8, 32>}, {transform_indices = @transform_1, window_bounds = array<i64: 1, 32, 192>}, {transform_indices = @transform_2, window_bounds = array<i64: 1, 1, 192>}, {transform_indices = @transform_3, window_bounds = array<i64: 1, 192, 96>}, {transform_indices = @transform_4, window_bounds = array<i64: 1, 1, 96>}, {transform_indices = @transform_5, window_bounds = array<i64: 1, 96, 128>}, {transform_indices = @transform_6, window_bounds = array<i64: 1, 1, 128>}, {transform_indices = @transform_7, window_bounds = array<i64: 8, 128>}]} {
    %c0 = arith.constant 0 : index
    %c0_0 = arith.constant 0 : index
    %0 = vector.load %arg2[%c0, %c0_0] : memref<8x32xf32, #tpu.memory_space<vmem>>, vector<8x32xf32>
    %1 = arith.truncf %0 : vector<8x32xf32> to vector<8x32xbf16>
    %c0_1 = arith.constant 0 : index
    %c0_2 = arith.constant 0 : index
    %c0_3 = arith.constant 0 : index
    %2 = vector.load %arg3[%c0_1, %c0_2, %c0_3] : memref<1x32x192xbf16, #tpu.memory_space<vmem>>, vector<1x32x192xbf16>
    %3 = vector.shape_cast %2 : vector<1x32x192xbf16> to vector<32x192xbf16>
    %cst = arith.constant dense<0.000000e+00> : vector<8x192xf32>
    %4 = tpu.matmul %1, %3, %cst {dimension_numbers = #tpu.dot_dimension_numbers<[1], [0], [0], [1], [0, 0, 1, 1], [], []>} : vector<8x32xbf16>, vector<32x192xbf16>, vector<8x192xf32> -> vector<8x192xf32>
    %c0_4 = arith.constant 0 : index
    %c0_5 = arith.constant 0 : index
    %c0_6 = arith.constant 0 : index
    %5 = vector.load %arg4[%c0_4, %c0_5, %c0_6] : memref<1x1x192xf32, #tpu.memory_space<vmem>>, vector<1x1x192xf32>
    %6 = vector.shape_cast %5 : vector<1x1x192xf32> to vector<1x192xf32>
    %7 = vector.broadcast %6 : vector<1x192xf32> to vector<8x192xf32>
    %8 = arith.addf %4, %7 : vector<8x192xf32>
    %cst_7 = arith.constant 0.00999999977 : f32
    %9 = vector.broadcast %cst_7 : f32 to vector<8x192xf32>
    %10 = arith.mulf %9, %8 : vector<8x192xf32>
    %11 = arith.maximumf %8, %10 : vector<8x192xf32>
    %12 = arith.truncf %11 : vector<8x192xf32> to vector<8x192xbf16>
    %c0_8 = arith.constant 0 : index
    %c0_9 = arith.constant 0 : index
    %c0_10 = arith.constant 0 : index
    %13 = vector.load %arg5[%c0_8, %c0_9, %c0_10] : memref<1x192x96xbf16, #tpu.memory_space<vmem>>, vector<1x192x96xbf16>
    %14 = vector.shape_cast %13 : vector<1x192x96xbf16> to vector<192x96xbf16>
    %cst_11 = arith.constant dense<0.000000e+00> : vector<8x96xf32>
    %15 = tpu.matmul %12, %14, %cst_11 {dimension_numbers = #tpu.dot_dimension_numbers<[1], [0], [0], [1], [0, 0, 1, 1], [], []>} : vector<8x192xbf16>, vector<192x96xbf16>, vector<8x96xf32> -> vector<8x96xf32>
    %c0_12 = arith.constant 0 : index
    %c0_13 = arith.constant 0 : index
    %c0_14 = arith.constant 0 : index
    %16 = vector.load %arg6[%c0_12, %c0_13, %c0_14] : memref<1x1x96xf32, #tpu.memory_space<vmem>>, vector<1x1x96xf32>
    %17 = vector.shape_cast %16 : vector<1x1x96xf32> to vector<1x96xf32>
    %18 = vector.broadcast %17 : vector<1x96xf32> to vector<8x96xf32>
    %19 = arith.addf %15, %18 : vector<8x96xf32>
    %cst_15 = arith.constant 0.00999999977 : f32
    %20 = vector.broadcast %cst_15 : f32 to vector<8x96xf32>
    %21 = arith.mulf %20, %19 : vector<8x96xf32>
    %22 = arith.maximumf %19, %21 : vector<8x96xf32>
    %23 = arith.truncf %22 : vector<8x96xf32> to vector<8x96xbf16>
    %c0_16 = arith.constant 0 : index
    %c0_17 = arith.constant 0 : index
    %c0_18 = arith.constant 0 : index
    %24 = vector.load %arg7[%c0_16, %c0_17, %c0_18] : memref<1x96x128xbf16, #tpu.memory_space<vmem>>, vector<1x96x128xbf16>
    %25 = vector.shape_cast %24 : vector<1x96x128xbf16> to vector<96x128xbf16>
    %cst_19 = arith.constant dense<0.000000e+00> : vector<8x128xf32>
    %26 = tpu.matmul %23, %25, %cst_19 {dimension_numbers = #tpu.dot_dimension_numbers<[1], [0], [0], [1], [0, 0, 1, 1], [], []>} : vector<8x96xbf16>, vector<96x128xbf16>, vector<8x128xf32> -> vector<8x128xf32>
    %c0_20 = arith.constant 0 : index
    %c0_21 = arith.constant 0 : index
    %c0_22 = arith.constant 0 : index
    %27 = vector.load %arg8[%c0_20, %c0_21, %c0_22] : memref<1x1x128xf32, #tpu.memory_space<vmem>>, vector<1x1x128xf32>
    %28 = vector.shape_cast %27 : vector<1x1x128xf32> to vector<1x128xf32>
    %29 = vector.broadcast %28 : vector<1x128xf32> to vector<8x128xf32>
    %30 = arith.addf %26, %29 : vector<8x128xf32>
    %c0_23 = arith.constant 0 : index
    %c0_24 = arith.constant 0 : index
    %31 = vector.load %arg9[%c0_23, %c0_24] : memref<8x128xf32, #tpu.memory_space<vmem>>, vector<8x128xf32>
    tpu.vector_store %arg9[%c0_23, %c0_24], %30 {strides = array<i32>} : memref<8x128xf32, #tpu.memory_space<vmem>>, vector<8x128xf32>,
    return
  }
  func.func @transform_0(%arg0: i32, %arg1: i32) -> (i32, i32) {
    %c0_i32 = arith.constant 0 : i32
    %c0_i32_0 = arith.constant 0 : i32
    return %arg0, %c0_i32 : i32, i32
  }
  func.func @transform_1(%arg0: i32, %arg1: i32) -> (i32, i32, i32) {
    %c0_i32 = arith.constant 0 : i32
    %c0_i32_0 = arith.constant 0 : i32
    %c0_i32_1 = arith.constant 0 : i32
    return %arg1, %c0_i32, %c0_i32_0 : i32, i32, i32
  }
  func.func @transform_2(%arg0: i32, %arg1: i32) -> (i32, i32, i32) {
    %c0_i32 = arith.constant 0 : i32
    %c0_i32_0 = arith.constant 0 : i32
    %c0_i32_1 = arith.constant 0 : i32
    return %arg1, %c0_i32, %c0_i32_0 : i32, i32, i32
  }
  func.func @transform_3(%arg0: i32, %arg1: i32) -> (i32, i32, i32) {
    %c0_i32 = arith.constant 0 : i32
    %c0_i32_0 = arith.constant 0 : i32
    %c0_i32_1 = arith.constant 0 : i32
    return %arg1, %c0_i32, %c0_i32_0 : i32, i32, i32
  }
  func.func @transform_4(%arg0: i32, %arg1: i32) -> (i32, i32, i32) {
    %c0_i32 = arith.constant 0 : i32
    %c0_i32_0 = arith.constant 0 : i32
    %c0_i32_1 = arith.constant 0 : i32
    return %arg1, %c0_i32, %c0_i32_0 : i32, i32, i32
  }
  func.func @transform_5(%arg0: i32, %arg1: i32) -> (i32, i32, i32) {
    %c0_i32 = arith.constant 0 : i32
    %c0_i32_0 = arith.constant 0 : i32
    %c0_i32_1 = arith.constant 0 : i32
    return %arg1, %c0_i32, %c0_i32_0 : i32, i32, i32
  }
  func.func @transform_6(%arg0: i32, %arg1: i32) -> (i32, i32, i32) {
    %c0_i32 = arith.constant 0 : i32
    %c0_i32_0 = arith.constant 0 : i32
    %c0_i32_1 = arith.constant 0 : i32
    return %arg1, %c0_i32, %c0_i32_0 : i32, i32, i32
  }
  func.func @transform_7(%arg0: i32, %arg1: i32) -> (i32, i32) {
    %c0_i32 = arith.constant 0 : i32
    return %arg0, %arg1 : i32, i32
  }
}

</mosaic_0001>

<llo_original>
// kernel: tpu_custom_call.1
$region0: #{tpu_custom_call.1}
  #allocation0 [shape = 'u32[]', space=smem, size = 0x4, offset = 0x4, fixed_abs, tag = 'smem constant byte address 0x4 - core index']
  #allocation1 [shape = 'u32[72,128]{1,0:T(1,128)}', space=vmem, size = 0x9000, scoped, tag = 'internal scratch']
  %s0 = inlined_call_operand.hbm [shape: f32[8,32], index: 0, kind: input, shape index: {}]
  %s1 = inlined_call_operand.hbm [shape: bf16[2,32,192], index: 1, kind: input, shape index: {}]
  %s2 = inlined_call_operand.hbm [shape: f32[2,1,192], index: 2, kind: input, shape index: {}]
  %s3 = inlined_call_operand.hbm [shape: bf16[2,192,96], index: 3, kind: input, shape index: {}]
  %s4 = inlined_call_operand.vmem [shape: f32[2,1,96], index: 4, kind: input, shape index: {}]
  %s5 = inlined_call_operand.hbm [shape: bf16[2,96,128], index: 5, kind: input, shape index: {}]
  %s6 = inlined_call_operand.vmem [shape: f32[2,1,128], index: 6, kind: input, shape index: {}]
  %s7 = inlined_call_operand.hbm [shape: f32[8,256], index: 7, kind: output, shape index: {}]
  %s8 = sld [smem:[#allocation0]]
  $region81: #{tpu_custom_call.1} parent=0
    _
  %s10 = ssub.s32 1, %s8
  %s11 = scalar_select 0, %s10, %s8
  $region1: #{tpu_custom_call.1} parent=0
    #allocation2 [shape = 'u8[4096]{0}', space=vmem, size = 0x1000, scoped, tag = 'input window, operand 0, single buffered']
    #allocation3 [shape = 's32[2]{0}', space=sflag, size = 0x8, scoped, tag = 'scoped memory for tpu_custom_call.1']
    #allocation4 [shape = 's32[2]{0}', space=sflag, size = 0x8, scoped, tag = 'scoped memory for tpu_custom_call.1']
    #allocation5 [shape = 'u8[32768]{0}', space=vmem, size = 0x8000, scoped, tag = 'input window, operand 1']
    #allocation6 [shape = 's32[2]{0}', space=sflag, size = 0x8, scoped, tag = 'scoped memory for tpu_custom_call.1']
    #allocation7 [shape = 'u8[2048]{0}', space=vmem, size = 0x800, scoped, tag = 'input window, operand 2']
    #allocation8 [shape = 'u8[98304]{0}', space=vmem, size = 0x18000, scoped, tag = 'input window, operand 3']
    #allocation9 [shape = 's32[2]{0}', space=sflag, size = 0x8, scoped, tag = 'scoped memory for tpu_custom_call.1']
    #allocation10 [shape = 'u8[49152]{0}', space=vmem, size = 0xc000, scoped, tag = 'input window, operand 5']
    #allocation11 [shape = 'u8[8192]{0}', space=vmem, size = 0x2000, scoped, tag = 'output window, operand 0']
    %12 = vsyncpa [#allocation3], 0
    %13 = vsyncpa [#allocation6], 0
    %s14 = scalar_lea.sflag [#allocation6], 1
    %15 = vsyncpa %s14, 0
    %16 = vsyncpa [#allocation9], 0
    %s17 = scalar_lea.sflag [#allocation9], 1
    %18 = vsyncpa %s17, 0
    %19 = vsyncpa [#allocation4], 0
    %s20 = scalar_lea.sflag [#allocation4], 1
    %21 = vsyncpa %s20, 0
    loop: start=0, step=1, limit=4
    $region2: #{tpu_custom_call.1} parent=1 // loop_pre_header
      _
    $region3: #{tpu_custom_call.1} parent=1 // loop_header
      %s23 = sphi 0, %s27
      %p24 = scmp.ge.s32.totalorder %s23, 4
      %s30 = sphi 0, %s42
      %s31 = sphi 0, %s38
      %s32 = sphi 0, %s30
      %s33 = sphi 0, %s31
      %s34 = sphi 0, %s32
      %s35 = sphi 0, %s33
      %s45 = sphi 0, %s47
      %s48 = sphi 0, %s45
      %s49 = sphi 0, %s48
      %s65 = sphi 0, %s49
      %s71 = sphi 0, %s73
      %s74 = sphi 0, %s71
      %s75 = sphi 0, %s74
      %s91 = sphi 0, %s75
      %s97 = sphi 0, %s99
      %s100 = sphi 0, %s97
      %s101 = sphi 0, %s100
      %s117 = sphi 0, %s101
      %s123 = sphi 0, %s125
      %s126 = sphi 0, %s123
      %s127 = sphi 0, %s126
      %s143 = sphi 0, %s127
      %s149 = sphi 0, %s151
      %s152 = sphi 0, %s149
      %s153 = sphi 0, %s152
      %s169 = sphi 0, %s153
      %s175 = sphi 0, %s177
      %s178 = sphi 0, %s175
      %s179 = sphi 0, %s178
      %s195 = sphi 0, %s179
      %s201 = sphi 0, %s203
      %s204 = sphi 0, %s201
      %s205 = sphi 0, %s204
      %s221 = sphi 0, %s205
      %s229 = sphi 0, %s231
      %s232 = sphi 0, %s229
      %s233 = sphi 0, %s232
      %s249 = sphi 0, %s233
    $region4: #{tpu_custom_call.1} parent=1 // loop_header_branch
      %26 = sbr.rel (%p24) target = $region8
    $region5: #{tpu_custom_call.1} parent=1 // loop_body
      %s28 = ssub.s32 %s23, 1
      %s29 = ssub.s32 %s23, 2
      %s36 = sadd.s32 1, %s31
      %p37 = scmp.ge.s32.totalorder %s36, 2
      %s38 = scalar_select %p37, 0, %s36
      %s39 = sadd.s32 1, %s30
      %s40 = scalar_select %p37, %s39, %s30
      %p41 = scmp.ge.s32.totalorder %s40, 1
      %s42 = scalar_select %p41, 0, %s40
      %s43 = ssub.s32 %s30, %s42
      %p44 = scmp.eq.s32.totalorder %s43, 0
      %s46 = sadd.s32 %s45, 1
      %s47 = scalar_select %p44, %s45, %s46
      %p50 = pneg %p44
      %p51 = scmp.eq.s32.totalorder %s23, 1
      %p52 = por %p50, %p51
      %p53 = scmp.ne.s32.totalorder %s45, %s48
      %p54 = scmp.eq.s32.totalorder %s23, 0
      %p55 = por %p53, %p54
      %p56 = scmp.ne.s32.totalorder %s45, %s48
      %p57 = scmp.eq.s32.totalorder %s28, 1
      %p58 = por %p56, %p57
      %p59 = scmp.ne.s32.totalorder %s48, %s49
      %p60 = scmp.eq.s32.totalorder %s28, 0
      %p61 = por %p59, %p60
      %p62 = scmp.ne.s32.totalorder %s48, %s49
      %p63 = scmp.eq.s32.totalorder %s29, 1
      %p64 = por %p62, %p63
      %p66 = scmp.ne.s32.totalorder %s49, %s65
      %p67 = scmp.eq.s32.totalorder %s29, 0
      %p68 = por %p66, %p67
      %s69 = ssub.s32 %s31, %s38
      %p70 = scmp.eq.s32.totalorder %s69, 0
      %s72 = sadd.s32 %s71, 1
      %s73 = scalar_select %p70, %s71, %s72
      %p76 = pneg %p70
      %p77 = scmp.eq.s32.totalorder %s23, 1
      %p78 = por %p76, %p77
      %p79 = scmp.ne.s32.totalorder %s71, %s74
      %p80 = scmp.eq.s32.totalorder %s23, 0
      %p81 = por %p79, %p80
      %p82 = scmp.ne.s32.totalorder %s71, %s74
      %p83 = scmp.eq.s32.totalorder %s28, 1
      %p84 = por %p82, %p83
      %p85 = scmp.ne.s32.totalorder %s74, %s75
      %p86 = scmp.eq.s32.totalorder %s28, 0
      %p87 = por %p85, %p86
      %p88 = scmp.ne.s32.totalorder %s74, %s75
      %p89 = scmp.eq.s32.totalorder %s29, 1
      %p90 = por %p88, %p89
      %p92 = scmp.ne.s32.totalorder %s75, %s91
      %p93 = scmp.eq.s32.totalorder %s29, 0
      %p94 = por %p92, %p93
      %s95 = ssub.s32 %s31, %s38
      %p96 = scmp.eq.s32.totalorder %s95, 0
      %s98 = sadd.s32 %s97, 1
      %s99 = scalar_select %p96, %s97, %s98
      %p102 = pneg %p96
      %p103 = scmp.eq.s32.totalorder %s23, 1
      %p104 = por %p102, %p103
      %p105 = scmp.ne.s32.totalorder %s97, %s100
      %p106 = scmp.eq.s32.totalorder %s23, 0
      %p107 = por %p105, %p106
      %p108 = scmp.ne.s32.totalorder %s97, %s100
      %p109 = scmp.eq.s32.totalorder %s28, 1
      %p110 = por %p108, %p109
      %p111 = scmp.ne.s32.totalorder %s100, %s101
      %p112 = scmp.eq.s32.totalorder %s28, 0
      %p113 = por %p111, %p112
      %p114 = scmp.ne.s32.totalorder %s100, %s101
      %p115 = scmp.eq.s32.totalorder %s29, 1
      %p116 = por %p114, %p115
      %p118 = scmp.ne.s32.totalorder %s101, %s117
      %p119 = scmp.eq.s32.totalorder %s29, 0
      %p120 = por %p118, %p119
      %s121 = ssub.s32 %s31, %s38
      %p122 = scmp.eq.s32.totalorder %s121, 0
      %s124 = sadd.s32 %s123, 1
      %s125 = scalar_select %p122, %s123, %s124
      %p128 = pneg %p122
      %p129 = scmp.eq.s32.totalorder %s23, 1
      %p130 = por %p128, %p129
      %p131 = scmp.ne.s32.totalorder %s123, %s126
      %p132 = scmp.eq.s32.totalorder %s23, 0
      %p133 = por %p131, %p132
      %p134 = scmp.ne.s32.totalorder %s123, %s126
      %p135 = scmp.eq.s32.totalorder %s28, 1
      %p136 = por %p134, %p135
      %p137 = scmp.ne.s32.totalorder %s126, %s127
      %p138 = scmp.eq.s32.totalorder %s28, 0
      %p139 = por %p137, %p138
      %p140 = scmp.ne.s32.totalorder %s126, %s127
      %p141 = scmp.eq.s32.totalorder %s29, 1
      %p142 = por %p140, %p141
      %p144 = scmp.ne.s32.totalorder %s127, %s143
      %p145 = scmp.eq.s32.totalorder %s29, 0
      %p146 = por %p144, %p145
      %s147 = ssub.s32 %s31, %s38
      %p148 = scmp.eq.s32.totalorder %s147, 0
      %s150 = sadd.s32 %s149, 1
      %s151 = scalar_select %p148, %s149, %s150
      %p154 = pneg %p148
      %p155 = scmp.eq.s32.totalorder %s23, 1
      %p156 = por %p154, %p155
      %p157 = scmp.ne.s32.totalorder %s149, %s152
      %p158 = scmp.eq.s32.totalorder %s23, 0
      %p159 = por %p157, %p158
      %p160 = scmp.ne.s32.totalorder %s149, %s152
      %p161 = scmp.eq.s32.totalorder %s28, 1
      %p162 = por %p160, %p161
      %p163 = scmp.ne.s32.totalorder %s152, %s153
      %p164 = scmp.eq.s32.totalorder %s28, 0
      %p165 = por %p163, %p164
      %p166 = scmp.ne.s32.totalorder %s152, %s153
      %p167 = scmp.eq.s32.totalorder %s29, 1
      %p168 = por %p166, %p167
      %p170 = scmp.ne.s32.totalorder %s153, %s169
      %p171 = scmp.eq.s32.totalorder %s29, 0
      %p172 = por %p170, %p171
      %s173 = ssub.s32 %s31, %s38
      %p174 = scmp.eq.s32.totalorder %s173, 0
      %s176 = sadd.s32 %s175, 1
      %s177 = scalar_select %p174, %s175, %s176
      %p180 = pneg %p174
      %p181 = scmp.eq.s32.totalorder %s23, 1
      %p182 = por %p180, %p181
      %p183 = scmp.ne.s32.totalorder %s175, %s178
      %p184 = scmp.eq.s32.totalorder %s23, 0
      %p185 = por %p183, %p184
      %p186 = scmp.ne.s32.totalorder %s175, %s178
      %p187 = scmp.eq.s32.totalorder %s28, 1
      %p188 = por %p186, %p187
      %p189 = scmp.ne.s32.totalorder %s178, %s179
      %p190 = scmp.eq.s32.totalorder %s28, 0
      %p191 = por %p189, %p190
      %p192 = scmp.ne.s32.totalorder %s178, %s179
      %p193 = scmp.eq.s32.totalorder %s29, 1
      %p194 = por %p192, %p193
      %p196 = scmp.ne.s32.totalorder %s179, %s195
      %p197 = scmp.eq.s32.totalorder %s29, 0
      %p198 = por %p196, %p197
      %s199 = ssub.s32 %s31, %s38
      %p200 = scmp.eq.s32.totalorder %s199, 0
      %s202 = sadd.s32 %s201, 1
      %s203 = scalar_select %p200, %s201, %s202
      %p206 = pneg %p200
      %p207 = scmp.eq.s32.totalorder %s23, 1
      %p208 = por %p206, %p207
      %p209 = scmp.ne.s32.totalorder %s201, %s204
      %p210 = scmp.eq.s32.totalorder %s23, 0
      %p211 = por %p209, %p210
      %p212 = scmp.ne.s32.totalorder %s201, %s204
      %p213 = scmp.eq.s32.totalorder %s28, 1
      %p214 = por %p212, %p213
      %p215 = scmp.ne.s32.totalorder %s204, %s205
      %p216 = scmp.eq.s32.totalorder %s28, 0
      %p217 = por %p215, %p216
      %p218 = scmp.ne.s32.totalorder %s204, %s205
      %p219 = scmp.eq.s32.totalorder %s29, 1
      %p220 = por %p218, %p219
      %p222 = scmp.ne.s32.totalorder %s205, %s221
      %p223 = scmp.eq.s32.totalorder %s29, 0
      %p224 = por %p222, %p223
      %s225 = ssub.s32 %s30, %s42
      %s226 = ssub.s32 %s31, %s38
      %s227 = sor.u32 %s225, %s226
      %p228 = scmp.eq.s32.totalorder %s227, 0
      %s230 = sadd.s32 %s229, 1
      %s231 = scalar_select %p228, %s229, %s230
      %p234 = pneg %p228
      %p235 = scmp.eq.s32.totalorder %s23, 1
      %p236 = por %p234, %p235
      %p237 = scmp.ne.s32.totalorder %s229, %s232
      %p238 = scmp.eq.s32.totalorder %s23, 0
      %p239 = por %p237, %p238
      %p240 = scmp.ne.s32.totalorder %s229, %s232
      %p241 = scmp.eq.s32.totalorder %s28, 1
      %p242 = por %p240, %p241
      %p243 = scmp.ne.s32.totalorder %s232, %s233
      %p244 = scmp.eq.s32.totalorder %s28, 0
      %p245 = por %p243, %p244
      %p246 = scmp.ne.s32.totalorder %s232, %s233
      %p247 = scmp.eq.s32.totalorder %s29, 1
      %p248 = por %p246, %p247
      %p250 = scmp.ne.s32.totalorder %s233, %s249
      %p251 = scmp.eq.s32.totalorder %s29, 0
      %p252 = por %p250, %p251
      %p253 = scmp.le.s32.totalorder 1, %s23
      %p254 = scmp.lt.s32.totalorder %s23, 3
      %p255 = pnand %p253, %p254
      %p256 = pneg %p255
      // Predicated region
      $region9: #{tpu_custom_call.1} parent=5 // pred_check
        _
      $region10: #{tpu_custom_call.1} parent=5 // pred_check_branch
        %258 = sbr.rel (%p255) target = $region12
      $region11: #{tpu_custom_call.1} parent=5 // pred_region
        %s259 = ssub.s32 %s23, 1
        // Predicated region
        $region13: #{tpu_custom_call.1} parent=11 // pred_check
          %p260 = pneg %p61
        $region14: #{tpu_custom_call.1} parent=11 // pred_check_branch
          %262 = sbr.rel (%p260) target = $region16
        $region15: #{tpu_custom_call.1} parent=11 // pred_region
          %264 = vsyncadd [#allocation3], 0
          %s265 = smul.addr %s32, 8
          %s266 = scalar_lea.hbm %s0, %s265
          %s268 = sshll.u32 %s266, 4
          %s269 = int_to_ptr.hbm [resolvable:$true] %s268
          %s270 = sshll.u32 [#allocation2], 4
          %s271 = int_to_ptr.vmem [resolvable:$true] %s270
          %273 = dma.hbm_to_vmem [thread:$0]  %s269, 128, %s271, [#allocation3]
        $region16: #{tpu_custom_call.1} parent=11 // pred_fallthru
          _
      $region12: #{tpu_custom_call.1} parent=5 // pred_fallthru
        _
      %p274 = scmp.lt.s32.totalorder %s23, 2
      // Predicated region
      $region17: #{tpu_custom_call.1} parent=5 // pred_check
        %p275 = pneg %p274
      $region18: #{tpu_custom_call.1} parent=5 // pred_check_branch
        %277 = sbr.rel (%p275) target = $region20
      $region19: #{tpu_custom_call.1} parent=5 // pred_region
        // Predicated region
        $region21: #{tpu_custom_call.1} parent=19 // pred_check
          %p278 = pneg %p81
        $region22: #{tpu_custom_call.1} parent=19 // pred_check_branch
          %280 = sbr.rel (%p278) target = $region24
        $region23: #{tpu_custom_call.1} parent=19 // pred_region
          %s281 = sand.u32 %s23, 1
          %s282 = scalar_lea.sflag [#allocation6], %s281
          %s283 = sand.u32 %s71, 1
          %s284 = smul.addr %s283, 32
          %s285 = scalar_lea.vmem [#allocation5], %s284
          %287 = vsyncadd %s282, 0
          %s288 = smul.addr %s31, 8
          %s289 = smul.addr %s288, 4
          %s290 = scalar_lea.hbm %s1, %s289
          %s291 = sshll.u32 %s290, 4
          %s292 = int_to_ptr.hbm [resolvable:$true] %s291
          %s293 = sshll.u32 %s285, 4
          %s294 = int_to_ptr.vmem [resolvable:$true] %s293
          %299 = dma.hbm_to_vmem [thread:$0]  %s292, 512, %s294, %s282, 128, 128, 8
        $region24: #{tpu_custom_call.1} parent=19 // pred_fallthru
          _
        // Predicated region
        $region25: #{tpu_custom_call.1} parent=19 // pred_check
          %p300 = pneg %p107
        $region26: #{tpu_custom_call.1} parent=19 // pred_check_branch
          %302 = sbr.rel (%p300) target = $region28
        $region27: #{tpu_custom_call.1} parent=19 // pred_region
          %s303 = sand.u32 %s23, 1
          %s304 = scalar_lea.sflag [#allocation6], %s303
          %s305 = sand.u32 %s97, 1
          %s306 = smul.addr %s305, 2
          %s307 = scalar_lea.vmem [#allocation7], %s306
          %309 = vsyncadd %s304, 0
          %s310 = smul.addr %s31, 2
          %s311 = scalar_lea.hbm %s2, %s310
          %s313 = sshll.u32 %s311, 4
          %s314 = int_to_ptr.hbm [resolvable:$true] %s313
          %s315 = sshll.u32 %s307, 4
          %s316 = int_to_ptr.vmem [resolvable:$true] %s315
          %318 = dma.hbm_to_vmem [thread:$0]  %s314, 32, %s316, %s304
        $region28: #{tpu_custom_call.1} parent=19 // pred_fallthru
          _
        // Predicated region
        $region29: #{tpu_custom_call.1} parent=19 // pred_check
          %p319 = pneg %p133
        $region30: #{tpu_custom_call.1} parent=19 // pred_check_branch
          %321 = sbr.rel (%p319) target = $region32
        $region31: #{tpu_custom_call.1} parent=19 // pred_region
          %s322 = sand.u32 %s23, 1
          %s323 = scalar_lea.sflag [#allocation9], %s322
          %s324 = sand.u32 %s123, 1
          %s325 = smul.addr %s324, 96
          %s326 = scalar_lea.vmem [#allocation8], %s325
          %328 = vsyncadd %s323, 0
          %s329 = smul.addr %s31, 24
          %s330 = smul.addr %s329, 4
          %s331 = scalar_lea.hbm %s3, %s330
          %s332 = sshll.u32 %s331, 4
          %s333 = int_to_ptr.hbm [resolvable:$true] %s332
          %s334 = sshll.u32 %s326, 4
          %s335 = int_to_ptr.vmem [resolvable:$true] %s334
          %340 = dma.hbm_to_vmem [thread:$0]  %s333, 1536, %s335, %s323, 64, 64, 4
        $region32: #{tpu_custom_call.1} parent=19 // pred_fallthru
          _
        // Predicated region
        $region33: #{tpu_custom_call.1} parent=19 // pred_check
          %p341 = pneg %p159
        $region34: #{tpu_custom_call.1} parent=19 // pred_check_branch
          %343 = sbr.rel (%p341) target = $region36
        $region35: #{tpu_custom_call.1} parent=19 // pred_region
          %p344 = scmp.lt.s32.totalorder %s31, 1
          %s345 = scalar_select %p344, %s31, 1
          %s346 = scalar_lea.vmem %s4, %s345
        $region36: #{tpu_custom_call.1} parent=19 // pred_fallthru
          _
        // Predicated region
        $region37: #{tpu_custom_call.1} parent=19 // pred_check
          %p347 = pneg %p185
        $region38: #{tpu_custom_call.1} parent=19 // pred_check_branch
          %349 = sbr.rel (%p347) target = $region40
        $region39: #{tpu_custom_call.1} parent=19 // pred_region
          %s350 = sand.u32 %s23, 1
          %s351 = scalar_lea.sflag [#allocation9], %s350
          %s352 = sand.u32 %s175, 1
          %s353 = smul.addr %s352, 48
          %s354 = scalar_lea.vmem [#allocation10], %s353
          %356 = vsyncadd %s351, 0
          %s357 = smul.addr %s31, 12
          %s358 = smul.addr %s357, 4
          %s359 = scalar_lea.hbm %s5, %s358
          %s360 = sshll.u32 %s359, 4
          %s361 = int_to_ptr.hbm [resolvable:$true] %s360
          %s362 = sshll.u32 %s354, 4
          %s363 = int_to_ptr.vmem [resolvable:$true] %s362
          %368 = dma.hbm_to_vmem [thread:$0]  %s361, 768, %s363, %s351, 64, 64, 4
        $region40: #{tpu_custom_call.1} parent=19 // pred_fallthru
          _
        // Predicated region
        $region41: #{tpu_custom_call.1} parent=19 // pred_check
          %p369 = pneg %p211
        $region42: #{tpu_custom_call.1} parent=19 // pred_check_branch
          %371 = sbr.rel (%p369) target = $region44
        $region43: #{tpu_custom_call.1} parent=19 // pred_region
          %p372 = scmp.lt.s32.totalorder %s31, 1
          %s373 = scalar_select %p372, %s31, 1
          %s374 = scalar_lea.vmem %s6, %s373
        $region44: #{tpu_custom_call.1} parent=19 // pred_fallthru
          _
      $region20: #{tpu_custom_call.1} parent=5 // pred_fallthru
        _
      %p375 = scmp.le.s32.totalorder 1, %s23
      %p376 = scmp.lt.s32.totalorder %s23, 3
      %p377 = pnand %p375, %p376
      %p378 = pneg %p377
      // Predicated region
      $region45: #{tpu_custom_call.1} parent=5 // pred_check
        _
      $region46: #{tpu_custom_call.1} parent=5 // pred_check_branch
        %380 = sbr.rel (%p377) target = $region48
      $region47: #{tpu_custom_call.1} parent=5 // pred_region
        %s381 = ssub.s32 %s23, 1
        // Predicated region
        $region49: #{tpu_custom_call.1} parent=47 // pred_check
          %p382 = pneg %p61
        $region50: #{tpu_custom_call.1} parent=47 // pred_check_branch
          %384 = sbr.rel (%p382) target = $region52
        $region51: #{tpu_custom_call.1} parent=47 // pred_region
          %386 = dma.done [#allocation3], 128
        $region52: #{tpu_custom_call.1} parent=47 // pred_fallthru
          _
        %s387 = sand.u32 %s28, 1
        %s388 = scalar_lea.sflag [#allocation6], %s387
        %s389 = sand.u32 %s74, 1
        %s390 = smul.addr %s389, 32
        %s391 = scalar_lea.vmem [#allocation5], %s390
        // Predicated region
        $region53: #{tpu_custom_call.1} parent=47 // pred_check
          %p392 = pneg %p87
        $region54: #{tpu_custom_call.1} parent=47 // pred_check_branch
          %394 = sbr.rel (%p392) target = $region56
        $region55: #{tpu_custom_call.1} parent=47 // pred_region
          %396 = dma.done %s388, 512
        $region56: #{tpu_custom_call.1} parent=47 // pred_fallthru
          _
        %s397 = sand.u32 %s28, 1
        %s398 = scalar_lea.sflag [#allocation6], %s397
        %s399 = sand.u32 %s100, 1
        %s400 = smul.addr %s399, 2
        %s401 = scalar_lea.vmem [#allocation7], %s400
        // Predicated region
        $region57: #{tpu_custom_call.1} parent=47 // pred_check
          %p402 = pneg %p113
        $region58: #{tpu_custom_call.1} parent=47 // pred_check_branch
          %404 = sbr.rel (%p402) target = $region60
        $region59: #{tpu_custom_call.1} parent=47 // pred_region
          %406 = dma.done %s398, 32
        $region60: #{tpu_custom_call.1} parent=47 // pred_fallthru
          _
        %s407 = sand.u32 %s28, 1
        %s408 = scalar_lea.sflag [#allocation9], %s407
        %s409 = sand.u32 %s126, 1
        %s410 = smul.addr %s409, 96
        %s411 = scalar_lea.vmem [#allocation8], %s410
        // Predicated region
        $region61: #{tpu_custom_call.1} parent=47 // pred_check
          %p412 = pneg %p139
        $region62: #{tpu_custom_call.1} parent=47 // pred_check_branch
          %414 = sbr.rel (%p412) target = $region64
        $region63: #{tpu_custom_call.1} parent=47 // pred_region
          %416 = dma.done %s408, 1536
        $region64: #{tpu_custom_call.1} parent=47 // pred_fallthru
          _
        %s417 = sand.u32 %s28, 1
        %s418 = scalar_lea.sflag [#allocation9], %s417
        %s419 = sand.u32 %s178, 1
        %s420 = smul.addr %s419, 48
        %s421 = scalar_lea.vmem [#allocation10], %s420
        // Predicated region
        $region65: #{tpu_custom_call.1} parent=47 // pred_check
          %p422 = pneg %p191
        $region66: #{tpu_custom_call.1} parent=47 // pred_check_branch
          %424 = sbr.rel (%p422) target = $region68
        $region67: #{tpu_custom_call.1} parent=47 // pred_region
          %426 = dma.done %s418, 768
        $region68: #{tpu_custom_call.1} parent=47 // pred_fallthru
          _
        %p427 = pneg %p61
        %p428 = pneg %p58
        %s429 = sand.u32 %s28, 1
        %s430 = scalar_lea.sflag [#allocation6], %s429
        %s431 = sand.u32 %s74, 1
        %s432 = smul.addr %s431, 32
        %s433 = scalar_lea.vmem [#allocation5], %s432
        %p434 = pneg %p87
        %p435 = pneg %p84
        %s436 = sand.u32 %s28, 1
        %s437 = scalar_lea.sflag [#allocation6], %s436
        %s438 = sand.u32 %s100, 1
        %s439 = smul.addr %s438, 2
        %s440 = scalar_lea.vmem [#allocation7], %s439
        %p441 = pneg %p113
        %p442 = pneg %p110
        %s443 = sand.u32 %s28, 1
        %s444 = scalar_lea.sflag [#allocation9], %s443
        %s445 = sand.u32 %s126, 1
        %s446 = smul.addr %s445, 96
        %s447 = scalar_lea.vmem [#allocation8], %s446
        %p448 = pneg %p139
        %p449 = pneg %p136
        %p450 = scmp.lt.s32.totalorder %s33, 1
        %s451 = scalar_select %p450, %s33, 1
        %s452 = scalar_lea.vmem %s4, %s451
        %p453 = pneg %p165
        %p454 = pneg %p162
        %s455 = sand.u32 %s28, 1
        %s456 = scalar_lea.sflag [#allocation9], %s455
        %s457 = sand.u32 %s178, 1
        %s458 = smul.addr %s457, 48
        %s459 = scalar_lea.vmem [#allocation10], %s458
        %p460 = pneg %p191
        %p461 = pneg %p188
        %p462 = scmp.lt.s32.totalorder %s33, 1
        %s463 = scalar_select %p462, %s33, 1
        %s464 = scalar_lea.vmem %s6, %s463
        %p465 = pneg %p217
        %p466 = pneg %p214
        %p467 = pneg %p245
        %p468 = pneg %p242
        %s469 = sand.u32 %s232, 1
        %s470 = scalar_lea.sflag [#allocation4], %s469
        %s471 = sand.u32 %s232, 1
        %s472 = smul.addr %s471, 8
        %s473 = scalar_lea.vmem [#allocation11], %s472
        %p474 = scmp.lt.s32.totalorder %s33, 1
        %s475 = scalar_select %p474, %s33, 1
        %s476 = scalar_lea.vmem %s4, %s475
        %p477 = scmp.lt.s32.totalorder %s33, 1
        %s478 = scalar_select %p477, %s33, 1
        %s479 = scalar_lea.vmem %s6, %s478
        %v481 = vld [vmem:[#allocation2] sm:$0xff]
        %v482 = vpack.c.bf16 %v481, %v481
        %v483 = vld [vmem:[%s391] sm:$0xff]
        %v484 = vld [vmem:[%s391 + $0x8] sm:$0xff]
        %v485 = vld [vmem:[%s391 + $0x10] sm:$0xff]
        %v486 = vld [vmem:[%s391 + $0x18] sm:$0xff]
        %v487 = vld [vmem:[%s401] sm:$0x3]
        %v489 = vperm.slane %v487, 0
        %v490 = vperm.slane %v487, 1
        %v497 = vunpack.c.l.b16 %v483
        %v498 = vunpack.c.h.b16 %v483
        %v499 = vunpack.c.l.b16 %v484
        %v500 = vunpack.c.h.b16 %v484
        %v501 = vunpack.c.l.b16 %v485
        %v502 = vunpack.c.h.b16 %v485
        %v503 = vunpack.c.l.b16 %v486
        %v504 = vunpack.c.h.b16 %v486
        %v505 = vpack.c.b16 %v499, %v497
        %v506 = vpack.c.b16 %v500, %v498
        %v507 = vpack.c.b16 %v503, %v501
        %v508 = vpack.c.b16 %v504, %v502
        %vm513 = vcmask 261120
        %v515 = vsel %vm513, %v482, 0
        %517 = vmatpush.bf16.msra.mxu0 0
        %518 = vmatpush.bf16.msra.mxu0 0
        %519 = vmatpush.bf16.msra.mxu0 0
        %520 = vmatpush.bf16.msra.mxu0 0
        %521 = vmatpush.bf16.msra.mxu0 0
        %522 = vmatpush.bf16.msra.mxu0 0
        %523 = vmatpush.bf16.msra.mxu0 %v507
        %524 = vmatpush.bf16.msra.mxu0 %v505
        %525 = vmatmul.bf16.gmra.mxu0 %v515
        %v526 = vpop.f32.mrf.mxu0
        %v527 = vadd.f32 %v489, %v526
        %v528 = vpop.f32.mrf.mxu0
        %529 = vdwg.mxu0
        %530 = vmatpush.bf16.msra.mxu0 0
        %531 = vmatpush.bf16.msra.mxu0 0
        %532 = vmatpush.bf16.msra.mxu0 0
        %533 = vmatpush.bf16.msra.mxu0 0
        %534 = vmatpush.bf16.msra.mxu0 0
        %535 = vmatpush.bf16.msra.mxu0 0
        %536 = vmatpush.bf16.msra.mxu0 %v508
        %537 = vmatpush.bf16.msra.mxu0 %v506
        %538 = vmatmul.bf16.gmra.mxu0 %v515
        %v539 = vpop.f32.mrf.mxu0
        %v540 = vadd.f32 %v490, %v539
        %v541 = vpop.f32.mrf.mxu0
        %542 = vdwg.mxu0
        %v543 = vmul.f32 %v527, 0.01
        %v544 = vmul.f32 %v540, 0.01
        %v545 = vmax.f32 %v527, %v543
        %v546 = vmax.f32 %v540, %v544
        %v547 = vpack.c.bf16 %v545, %v545
        %v548 = vpack.c.bf16 %v546, %v546
        %v549 = vld [vmem:[%s411] sm:$0xf]
        %v550 = vld [vmem:[%s411 + $0x4] sm:$0xf]
        %v551 = vld [vmem:[%s411 + $0x8] sm:$0xf]
        %v552 = vld [vmem:[%s411 + $0xc] sm:$0xf]
        %v553 = vld [vmem:[%s411 + $0x10] sm:$0xf]
        %v554 = vld [vmem:[%s411 + $0x14] sm:$0xf]
        %v555 = vld [vmem:[%s411 + $0x18] sm:$0xf]
        %v556 = vld [vmem:[%s411 + $0x1c] sm:$0xf]
        %v557 = vld [vmem:[%s411 + $0x20] sm:$0xf]
        %v558 = vld [vmem:[%s411 + $0x24] sm:$0xf]
        %v559 = vld [vmem:[%s411 + $0x28] sm:$0xf]
        %v560 = vld [vmem:[%s411 + $0x2c] sm:$0xf]
        %v561 = vld [vmem:[%s411 + $0x30] sm:$0xf]
        %v562 = vld [vmem:[%s411 + $0x34] sm:$0xf]
        %v563 = vld [vmem:[%s411 + $0x38] sm:$0xf]
        %v564 = vld [vmem:[%s411 + $0x3c] sm:$0xf]
        %v565 = vld [vmem:[%s411 + $0x40] sm:$0xf]
        %v566 = vld [vmem:[%s411 + $0x44] sm:$0xf]
        %v567 = vld [vmem:[%s411 + $0x48] sm:$0xf]
        %v568 = vld [vmem:[%s411 + $0x4c] sm:$0xf]
        %v569 = vld [vmem:[%s411 + $0x50] sm:$0xf]
        %v570 = vld [vmem:[%s411 + $0x54] sm:$0xf]
        %v571 = vld [vmem:[%s411 + $0x58] sm:$0xf]
        %v572 = vld [vmem:[%s411 + $0x5c] sm:$0xf]
        %v573 = vld [vmem:[%s476] sm:$0x1]
        %v575 = vperm.slane %v573, 0
        %v601 = vunpack.c.l.b16 %v549
        %v602 = vunpack.c.l.b16 %v550
        %v603 = vunpack.c.l.b16 %v551
        %v604 = vunpack.c.l.b16 %v552
        %v605 = vunpack.c.l.b16 %v553
        %v606 = vunpack.c.l.b16 %v554
        %v607 = vunpack.c.l.b16 %v555
        %v608 = vunpack.c.l.b16 %v556
        %v609 = vunpack.c.l.b16 %v557
        %v610 = vunpack.c.l.b16 %v558
        %v611 = vunpack.c.l.b16 %v559
        %v612 = vunpack.c.l.b16 %v560
        %v613 = vunpack.c.l.b16 %v561
        %v614 = vunpack.c.l.b16 %v562
        %v615 = vunpack.c.l.b16 %v563
        %v616 = vunpack.c.l.b16 %v564
        %v617 = vunpack.c.l.b16 %v565
        %v618 = vunpack.c.l.b16 %v566
        %v619 = vunpack.c.l.b16 %v567
        %v620 = vunpack.c.l.b16 %v568
        %v621 = vunpack.c.l.b16 %v569
        %v622 = vunpack.c.l.b16 %v570
        %v623 = vunpack.c.l.b16 %v571
        %v624 = vunpack.c.l.b16 %v572
        %v625 = vpack.c.b16 %v602, %v601
        %v626 = vpack.c.b16 %v604, %v603
        %v627 = vpack.c.b16 %v606, %v605
        %v628 = vpack.c.b16 %v608, %v607
        %v629 = vpack.c.b16 %v610, %v609
        %v630 = vpack.c.b16 %v612, %v611
        %v631 = vpack.c.b16 %v614, %v613
        %v632 = vpack.c.b16 %v616, %v615
        %v633 = vpack.c.b16 %v618, %v617
        %v634 = vpack.c.b16 %v620, %v619
        %v635 = vpack.c.b16 %v622, %v621
        %v636 = vpack.c.b16 %v624, %v623
        %vm649 = vcmask 523264
        %v651 = vsel %vm649, %v548, 0
        %653 = vmatpush.bf16.msra.mxu0 %v632
        %654 = vmatpush.bf16.msra.mxu0 %v631
        %655 = vmatpush.bf16.msra.mxu0 %v630
        %656 = vmatpush.bf16.msra.mxu0 %v629
        %657 = vmatpush.bf16.msra.mxu0 %v628
        %658 = vmatpush.bf16.msra.mxu0 %v627
        %659 = vmatpush.bf16.msra.mxu0 %v626
        %660 = vmatpush.bf16.msra.mxu0 %v625
        %661 = vmatmul.bf16.gmra.mxu0 %v547
        %v662 = vpop.f32.mrf.mxu0
        %v663 = vadd.f32 %v575, %v662
        %v664 = vpop.f32.mrf.mxu0
        %665 = vdwg.mxu0
        %666 = vmatpush.bf16.msra.mxu0 0
        %667 = vmatpush.bf16.msra.mxu0 0
        %668 = vmatpush.bf16.msra.mxu0 0
        %669 = vmatpush.bf16.msra.mxu0 0
        %670 = vmatpush.bf16.msra.mxu0 %v636
        %671 = vmatpush.bf16.msra.mxu0 %v635
        %672 = vmatpush.bf16.msra.mxu0 %v634
        %673 = vmatpush.bf16.msra.mxu0 %v633
        %674 = vmatmul.bf16.gmra.mxu0 %v651
        %v675 = vpop.f32.mrf.mxu0
        %v676 = vadd.f32 %v663, %v675
        %v677 = vpop.f32.mrf.mxu0
        %678 = vdwg.mxu0
        %v679 = vmul.f32 %v676, 0.01
        %v680 = vmax.f32 %v676, %v679
        %v681 = vpack.c.bf16 %v680, %v680
        %v682 = vld [vmem:[%s421] sm:$0xf]
        %v683 = vld [vmem:[%s421 + $0x4] sm:$0xf]
        %v684 = vld [vmem:[%s421 + $0x8] sm:$0xf]
        %v685 = vld [vmem:[%s421 + $0xc] sm:$0xf]
        %v686 = vld [vmem:[%s421 + $0x10] sm:$0xf]
        %v687 = vld [vmem:[%s421 + $0x14] sm:$0xf]
        %v688 = vld [vmem:[%s421 + $0x18] sm:$0xf]
        %v689 = vld [vmem:[%s421 + $0x1c] sm:$0xf]
        %v690 = vld [vmem:[%s421 + $0x20] sm:$0xf]
        %v691 = vld [vmem:[%s421 + $0x24] sm:$0xf]
        %v692 = vld [vmem:[%s421 + $0x28] sm:$0xf]
        %v693 = vld [vmem:[%s421 + $0x2c] sm:$0xf]
        %v694 = vld [vmem:[%s479] sm:$0x1]
        %v696 = vperm.slane %v694, 0
        %v710 = vunpack.c.l.b16 %v682
        %v711 = vunpack.c.l.b16 %v683
        %v712 = vunpack.c.l.b16 %v684
        %v713 = vunpack.c.l.b16 %v685
        %v714 = vunpack.c.l.b16 %v686
        %v715 = vunpack.c.l.b16 %v687
        %v716 = vunpack.c.l.b16 %v688
        %v717 = vunpack.c.l.b16 %v689
        %v718 = vunpack.c.l.b16 %v690
        %v719 = vunpack.c.l.b16 %v691
        %v720 = vunpack.c.l.b16 %v692
        %v721 = vunpack.c.l.b16 %v693
        %v722 = vpack.c.b16 %v711, %v710
        %v723 = vpack.c.b16 %v713, %v712
        %v724 = vpack.c.b16 %v715, %v714
        %v725 = vpack.c.b16 %v717, %v716
        %v726 = vpack.c.b16 %v719, %v718
        %v727 = vpack.c.b16 %v721, %v720
        %vm734 = vcmask 785408
        %v736 = vsel %vm734, %v681, 0
        %738 = vmatpush.bf16.msra.mxu0 0
        %739 = vmatpush.bf16.msra.mxu0 0
        %740 = vmatpush.bf16.msra.mxu0 %v727
        %741 = vmatpush.bf16.msra.mxu0 %v726
        %742 = vmatpush.bf16.msra.mxu0 %v725
        %743 = vmatpush.bf16.msra.mxu0 %v724
        %744 = vmatpush.bf16.msra.mxu0 %v723
        %745 = vmatpush.bf16.msra.mxu0 %v722
        %746 = vmatmul.bf16.gmra.mxu0 %v736
        %v747 = vpop.f32.mrf.mxu0
        %v748 = vadd.f32 %v696, %v747
        %v749 = vpop.f32.mrf.mxu0
        %750 = vdwg.mxu0
        %751 = vst [vmem:[%s473] sm:$0xff] %v748
        %s752 = sand.u32 %s232, 1
        %s753 = scalar_lea.sflag [#allocation4], %s752
        %s754 = sand.u32 %s232, 1
        %s755 = smul.addr %s754, 8
        %s756 = scalar_lea.vmem [#allocation11], %s755
        // Predicated region
        $region69: #{tpu_custom_call.1} parent=47 // pred_check
          %p757 = pneg %p242
        $region70: #{tpu_custom_call.1} parent=47 // pred_check_branch
          %759 = sbr.rel (%p757) target = $region72
        $region71: #{tpu_custom_call.1} parent=47 // pred_region
          %761 = vsyncadd %s753, 0
          %s762 = smul.addr %s32, 2
          %s763 = sadd.s32 %s33, %s762
          %s764 = smul.addr %s763, 8
          %s765 = scalar_lea.hbm %s7, %s764
          %s767 = sshll.u32 %s756, 4
          %s768 = int_to_ptr.vmem [resolvable:$true] %s767
          %s769 = sshll.u32 %s765, 4
          %s770 = int_to_ptr.hbm [resolvable:$true] %s769
          %772 = dma.vmem_to_hbm [thread:$0]  %s768, 128, %s770, %s753
        $region72: #{tpu_custom_call.1} parent=47 // pred_fallthru
          _
      $region48: #{tpu_custom_call.1} parent=5 // pred_fallthru
        _
      %p773 = scmp.le.s32.totalorder 2, %s23
      // Predicated region
      $region73: #{tpu_custom_call.1} parent=5 // pred_check
        %p774 = pneg %p773
      $region74: #{tpu_custom_call.1} parent=5 // pred_check_branch
        %776 = sbr.rel (%p774) target = $region76
      $region75: #{tpu_custom_call.1} parent=5 // pred_region
        %s777 = ssub.s32 %s23, 2
        // Predicated region
        $region77: #{tpu_custom_call.1} parent=75 // pred_check
          %p778 = pneg %p248
        $region78: #{tpu_custom_call.1} parent=75 // pred_check_branch
          %780 = sbr.rel (%p778) target = $region80
        $region79: #{tpu_custom_call.1} parent=75 // pred_region
          %s781 = sand.u32 %s233, 1
          %s782 = scalar_lea.sflag [#allocation4], %s781
          %s783 = sand.u32 %s233, 1
          %s784 = smul.addr %s783, 8
          %s785 = scalar_lea.vmem [#allocation11], %s784
          %787 = dma.done %s782, 128
        $region80: #{tpu_custom_call.1} parent=75 // pred_fallthru
          _
      $region76: #{tpu_custom_call.1} parent=5 // pred_fallthru
        _
    $region6: #{tpu_custom_call.1} parent=1 // loop_footer
      %s27 = sadd.s32 1, %s23
    $region7: #{tpu_custom_call.1} parent=1 // loop_footer_branch
      %22 = sbr.rel target = $region3
    $region8: #{tpu_custom_call.1} parent=1 // loop_exit
      _
    %788 = vsyncpa [#allocation3], 1
    %s789 = scalar_lea.sflag [#allocation3], 1
    %790 = vsyncpa %s789, 1
    %791 = vsyncpa [#allocation6], 1
    %s792 = scalar_lea.sflag [#allocation6], 1
    %793 = vsyncpa %s792, 1
    %794 = vsyncpa [#allocation9], 1
    %s795 = scalar_lea.sflag [#allocation9], 1
    %796 = vsyncpa %s795, 1
    %797 = vsyncpa [#allocation4], 1
    %s798 = scalar_lea.sflag [#allocation4], 1
    %799 = vsyncpa %s798, 1

</llo_original>
